<compile_context>
chip_gen: v5e
topology: v5e:2x2
jax: 0.10.0
libtpu: 0.0.40
codegen_flags: <defaults>
</compile_context>

<pallas_src>
import functools

import jax
import jax.numpy as jnp
from jax.experimental import pallas as pl
from jax.experimental.pallas import tpu as pltpu


def _round_up(v, m):
    return ((v + m - 1) // m) * m


def _aldnet0_kernel(params_ref, x_ref, w1_ref, t_ref, o_ref):
    # params_ref : SMEM f32[3] = [b1, w2, b2]     (scalar prefetch)
    # x_ref      : VMEM [TM, N]   batch tile of x (streamed)
    # w1_ref     : VMEM [1, N]    lane-dense linear_1 weight row (resident)
    # t_ref      : VMEM [1, TM]   lane-dense batch tile of t
    # o_ref      : VMEM [1, TM]   lane-dense output tile
    b1 = params_ref[0]
    w2 = params_ref[1]
    b2 = params_ref[2]

    x = x_ref[...].astype(jnp.float32)            # [TM, N]
    w1 = w1_ref[...].astype(jnp.float32)          # [1, N]

    # linear_1(x): VPU multiply + lane (XLU) reduce -> one scalar per row.
    lin1 = jnp.sum(x * w1, axis=-1)               # [TM]
    lin1 = lin1[None, :]                          # [1, TM] lane-dense

    # linear_2(t): scalar affine, f32.
    t = t_ref[...].astype(jnp.float32)            # [1, TM]
    lin2 = t * w2 + b2

    o_ref[...] = (lin1 + b1 + lin2).astype(o_ref.dtype)


def _choose_tm(b, n, itemsize):
    # Largest batch tile (multiple of 128) whose double-buffered x tile stays
    # well under the most restrictive scoped-VMEM default (v5e: 16 MiB).
    per_buffer_budget = 4 * 1024 * 1024            # 2 buffers -> <= 8 MiB for x
    n_pad = _round_up(max(n, 1), 128)              # lane padding of the x tile
    tm = per_buffer_budget // (n_pad * itemsize)
    tm = max(128, min(4096, (tm // 128) * 128))
    tm = min(tm, _round_up(max(b, 1), 128))        # don't exceed padded batch
    return tm


@functools.partial(jax.jit, static_argnames=("tm",))
def aldnet0_forward(x, t, w1, b1, w2, b2, *, tm=None):
    """ALDNet0 forward: linear_1(x) + linear_2(t).

    x: [B, N], t: [B, 1].  Params mirror nn.Linear(N, 1) / nn.Linear(1, 1):
    w1: [1, N], b1: [1], w2: [1, 1], b2: [1].  Returns [B, 1].
    """
    B, N = x.shape
    if tm is None:
        tm = _choose_tm(B, N, x.dtype.itemsize)
    B_pad = _round_up(B, tm)
    grid = B_pad // tm

    # Pad the batch to a multiple of the tile; padded rows are sliced off later.
    if B_pad != B:
        x_p = jnp.pad(x, ((0, B_pad - B), (0, 0)))
        t_p = jnp.pad(t, ((0, B_pad - B), (0, 0)))
    else:
        x_p, t_p = x, t

    # Lane-dense layouts for the tiny [B, 1] tensors (plumbing, not compute).
    t_row = t_p.reshape(1, B_pad)
    w1_row = w1.reshape(1, N)
    # Pack the three scalars into one SMEM scalar-prefetch array.
    params = jnp.concatenate(
        [b1.reshape(1), w2.reshape(1), b2.reshape(1)]).astype(jnp.float32)

    out_row = pl.pallas_call(
        _aldnet0_kernel,
        out_shape=jax.ShapeDtypeStruct((1, B_pad), x.dtype),
        grid_spec=pltpu.PrefetchScalarGridSpec(
            num_scalar_prefetch=1,
            grid=(grid,),
            in_specs=[
                pl.BlockSpec((tm, N), lambda i, p: (i, 0)),   # x: streamed tiles
                pl.BlockSpec((1, N), lambda i, p: (0, 0)),    # w1: resident row
                pl.BlockSpec((1, tm), lambda i, p: (0, i)),   # t: lane-dense
            ],
            out_specs=pl.BlockSpec((1, tm), lambda i, p: (0, i)),
        ),
        compiler_params=pltpu.CompilerParams(
            dimension_semantics=("parallel",)),
    )(params, x_p, w1_row, t_row)

    return out_row[0, :B].reshape(B, 1)


def init_params(key, N, dtype=jnp.float32):
    """Deterministic init matching nn.Linear's U(-1/sqrt(fan_in), 1/sqrt(fan_in))."""
    k1, k2, k3, k4 = jax.random.split(key, 4)
    bound1 = 1.0 / jnp.sqrt(N)
    w1 = jax.random.uniform(k1, (1, N), dtype, -bound1, bound1)   # linear_1.weight
    b1 = jax.random.uniform(k2, (1,), dtype, -bound1, bound1)     # linear_1.bias
    bound2 = 1.0                                                   # fan_in = 1
    w2 = jax.random.uniform(k3, (1, 1), dtype, -bound2, bound2)   # linear_2.weight
    b2 = jax.random.uniform(k4, (1,), dtype, -bound2, bound2)     # linear_2.bias
    return w1, b1, w2, b2


if __name__ == "__main__":
    B, N = 8, 32
    key = jax.random.PRNGKey(0)
    kx, kt, kp = jax.random.split(key, 3)

    x = jax.random.normal(kx, (B, N), jnp.float32)
    t = jax.random.normal(kt, (B, 1), jnp.float32)
    w1, b1, w2, b2 = init_params(kp, N)

    out = aldnet0_forward(x, t, w1, b1, w2, b2)
    out = jax.block_until_ready(out)

    ref = (x @ w1.T + b1) + (t @ w2.T + b2)
    assert out.shape == (B, 1)
    assert jnp.allclose(out, ref, atol=1e-5, rtol=1e-5)

    # Multi-tile path (grid > 1 with batch padding) sanity check.
    B2 = 300
    x2 = jax.random.normal(jax.random.PRNGKey(1), (B2, N), jnp.float32)
    t2 = jax.random.normal(jax.random.PRNGKey(2), (B2, 1), jnp.float32)
    out2 = jax.block_until_ready(
        aldnet0_forward(x2, t2, w1, b1, w2, b2, tm=128))
    ref2 = (x2 @ w1.T + b1) + (t2 @ w2.T + b2)
    assert out2.shape == (B2, 1)
    assert jnp.allclose(out2, ref2, atol=1e-5, rtol=1e-5)

    print("KERNEL_OK")
</pallas_src>

<mosaic_0001>
module attributes {stable_mosaic.version = 11 : i64} {
  func.func @_aldnet0_kernel(%arg0: i32, %arg1: memref<3xf32, #tpu.memory_space<smem>>, %arg2: memref<128x32xf32, #tpu.memory_space<vmem>>, %arg3: memref<1x32xf32, #tpu.memory_space<vmem>>, %arg4: memref<1x128xf32, #tpu.memory_space<vmem>>, %arg5: memref<1x128xf32, #tpu.memory_space<vmem>>) attributes {dimension_semantics = [#tpu.dimension_semantics<parallel>], iteration_bounds = array<i64: 1>, scalar_prefetch = 1 : i64, scratch_operands = 0 : i64, tpu.core_type = #tpu.core_type<tc>, window_params = [{transform_indices = @transform_0, window_bounds = array<i64: 128, 32>}, {pipeline_mode = #tpu.pipeline_mode<synchronous>, transform_indices = @transform_1, window_bounds = array<i64: 1, 32>}, {transform_indices = @transform_2, window_bounds = array<i64: 1, 128>}, {transform_indices = @transform_3, window_bounds = array<i64: 1, 128>}]} {
    %c0 = arith.constant 0 : index
    %0 = memref.load %arg1[%c0] : memref<3xf32, #tpu.memory_space<smem>>
    %c1 = arith.constant 1 : index
    %1 = memref.load %arg1[%c1] : memref<3xf32, #tpu.memory_space<smem>>
    %c2 = arith.constant 2 : index
    %2 = memref.load %arg1[%c2] : memref<3xf32, #tpu.memory_space<smem>>
    %c0_0 = arith.constant 0 : index
    %c0_1 = arith.constant 0 : index
    %3 = vector.load %arg2[%c0_0, %c0_1] : memref<128x32xf32, #tpu.memory_space<vmem>>, vector<128x32xf32>
    %c0_2 = arith.constant 0 : index
    %c0_3 = arith.constant 0 : index
    %4 = vector.load %arg3[%c0_2, %c0_3] : memref<1x32xf32, #tpu.memory_space<vmem>>, vector<1x32xf32>
    %5 = vector.broadcast %4 : vector<1x32xf32> to vector<128x32xf32>
    %6 = arith.mulf %3, %5 : vector<128x32xf32>
    %cst = arith.constant dense<0.000000e+00> : vector<128xf32>
    %7 = vector.multi_reduction <add>, %6, %cst [1] : vector<128x32xf32> to vector<128xf32>
    %8 = vector.shape_cast %7 : vector<128xf32> to vector<1x128xf32>
    %c0_4 = arith.constant 0 : index
    %c0_5 = arith.constant 0 : index
    %9 = vector.load %arg4[%c0_4, %c0_5] : memref<1x128xf32, #tpu.memory_space<vmem>>, vector<1x128xf32>
    %10 = vector.broadcast %1 : f32 to vector<1x128xf32>
    %11 = arith.mulf %9, %10 : vector<1x128xf32>
    %12 = vector.broadcast %2 : f32 to vector<1x128xf32>
    %13 = arith.addf %11, %12 : vector<1x128xf32>
    %14 = vector.broadcast %0 : f32 to vector<1x128xf32>
    %15 = arith.addf %8, %14 : vector<1x128xf32>
    %16 = arith.addf %15, %13 : vector<1x128xf32>
    %c0_6 = arith.constant 0 : index
    %c0_7 = arith.constant 0 : index
    %17 = vector.load %arg5[%c0_6, %c0_7] : memref<1x128xf32, #tpu.memory_space<vmem>>, vector<1x128xf32>
    tpu.vector_store %arg5[%c0_6, %c0_7], %16 {strides = array<i32>} : memref<1x128xf32, #tpu.memory_space<vmem>>, vector<1x128xf32>,
    return
  }
  func.func @transform_0(%arg0: i32, %arg1: memref<3xf32, #tpu.memory_space<smem>>) -> (i32, i32) {
    %c0_i32 = arith.constant 0 : i32
    %c0_i32_0 = arith.constant 0 : i32
    return %arg0, %c0_i32 : i32, i32
  }
  func.func @transform_1(%arg0: i32, %arg1: memref<3xf32, #tpu.memory_space<smem>>) -> (i32, i32) {
    %c0_i32 = arith.constant 0 : i32
    %c0_i32_0 = arith.constant 0 : i32
    %c0_i32_1 = arith.constant 0 : i32
    return %c0_i32, %c0_i32_0 : i32, i32
  }
  func.func @transform_2(%arg0: i32, %arg1: memref<3xf32, #tpu.memory_space<smem>>) -> (i32, i32) {
    %c0_i32 = arith.constant 0 : i32
    %c0_i32_0 = arith.constant 0 : i32
    return %c0_i32, %arg0 : i32, i32
  }
  func.func @transform_3(%arg0: i32, %arg1: memref<3xf32, #tpu.memory_space<smem>>) -> (i32, i32) {
    %c0_i32 = arith.constant 0 : i32
    %c0_i32_0 = arith.constant 0 : i32
    return %c0_i32, %arg0 : i32, i32
  }
}

</mosaic_0001>

<llo_original>
// kernel: aldnet0_forward.1
$region0: #{aldnet0_forward.1}
  #allocation0 [shape = 'u32[]', space=smem, size = 0x4, offset = 0x4, fixed_abs, tag = 'smem constant byte address 0x4 - core index']
  #allocation1 [shape = 'u32[72,128]{1,0:T(1,128)}', space=vmem, size = 0x9000, scoped, tag = 'internal scratch']
  #allocation2 [shape = 's32[1]{0}', space=sflag, size = 0x4, scoped, tag = 'scoped memory for aldnet0_forward.1']
  #allocation3 [shape = 'u8[512]{0}', space=smem, size = 0x200, scoped, tag = 'prefetched SMEM operand 0']
  %s0 = inlined_call_operand.vmem [shape: f32[3], index: 0, kind: input, shape index: {}]
  %s1 = inlined_call_operand.vmem [shape: f32[128,32], index: 1, kind: input, shape index: {}]
  %s2 = inlined_call_operand.vmem [shape: f32[1,32], index: 2, kind: input, shape index: {}]
  %s3 = inlined_call_operand.vmem [shape: f32[1,128], index: 3, kind: input, shape index: {}]
  %s4 = inlined_call_operand.vmem [shape: f32[1,128], index: 4, kind: output, shape index: {}]
  %s5 = sld [smem:[#allocation0]]
  $region22: #{aldnet0_forward.1} parent=0
    _
  %s7 = ssub.s32 1, %s5
  %s8 = scalar_select 0, %s7, %s5
  %s10 = sshll.u32 %s0, 4
  %s11 = int_to_ptr.vmem [resolvable:$true] %s10
  %13 = dma.vmem_to_smem %s11, 16, [#allocation3], [#allocation2]
  %15 = dma.done [#allocation2], 16
  %16 = sfence
  // Predicated region
  $region2: #{aldnet0_forward.1} parent=0 // pred_check
    _
  $region3: #{aldnet0_forward.1} parent=0 // pred_check_branch
    %18 = sbr.rel (0) target = $region5
  $region4: #{aldnet0_forward.1} parent=0 // pred_region
    _
  $region5: #{aldnet0_forward.1} parent=0 // pred_fallthru
    _
  // Predicated region
  $region6: #{aldnet0_forward.1} parent=0 // pred_check
    _
  $region7: #{aldnet0_forward.1} parent=0 // pred_check_branch
    %20 = sbr.rel (0) target = $region9
  $region8: #{aldnet0_forward.1} parent=0 // pred_region
    _
  $region9: #{aldnet0_forward.1} parent=0 // pred_fallthru
    _
  // Predicated region
  $region10: #{aldnet0_forward.1} parent=0 // pred_check
    _
  $region11: #{aldnet0_forward.1} parent=0 // pred_check_branch
    %22 = sbr.rel (0) target = $region13
  $region12: #{aldnet0_forward.1} parent=0 // pred_region
    _
  $region13: #{aldnet0_forward.1} parent=0 // pred_fallthru
    _
  %s23 = sld [smem:[#allocation3]]
  %s24 = sld [smem:[#allocation3 + $0x1]]
  %s25 = sld [smem:[#allocation3 + $0x2]]
  %v26 = vld [vmem:[%s1] sm:$0xff]
  %v27 = vld [vmem:[%s1 + $0x8] sm:$0xff]
  %v28 = vld [vmem:[%s1 + $0x10] sm:$0xff]
  %v29 = vld [vmem:[%s1 + $0x18] sm:$0xff]
  %v30 = vld [vmem:[%s1 + $0x20] sm:$0xff]
  %v31 = vld [vmem:[%s1 + $0x28] sm:$0xff]
  %v32 = vld [vmem:[%s1 + $0x30] sm:$0xff]
  %v33 = vld [vmem:[%s1 + $0x38] sm:$0xff]
  %v34 = vld [vmem:[%s1 + $0x40] sm:$0xff]
  %v35 = vld [vmem:[%s1 + $0x48] sm:$0xff]
  %v36 = vld [vmem:[%s1 + $0x50] sm:$0xff]
  %v37 = vld [vmem:[%s1 + $0x58] sm:$0xff]
  %v38 = vld [vmem:[%s1 + $0x60] sm:$0xff]
  %v39 = vld [vmem:[%s1 + $0x68] sm:$0xff]
  %v40 = vld [vmem:[%s1 + $0x70] sm:$0xff]
  %v41 = vld [vmem:[%s1 + $0x78] sm:$0xff]
  %v42 = vld [vmem:[%s2] sm:$0x1]
  %v44 = vperm.slane %v42, 0
  %v46 = vmul.f32 %v26, %v44
  %v47 = vmul.f32 %v27, %v44
  %v48 = vmul.f32 %v28, %v44
  %v49 = vmul.f32 %v29, %v44
  %v50 = vmul.f32 %v30, %v44
  %v51 = vmul.f32 %v31, %v44
  %v52 = vmul.f32 %v32, %v44
  %v53 = vmul.f32 %v33, %v44
  %v54 = vmul.f32 %v34, %v44
  %v55 = vmul.f32 %v35, %v44
  %v56 = vmul.f32 %v36, %v44
  %v57 = vmul.f32 %v37, %v44
  %v58 = vmul.f32 %v38, %v44
  %v59 = vmul.f32 %v39, %v44
  %v60 = vmul.f32 %v40, %v44
  %v61 = vmul.f32 %v41, %v44
  %vm62 = vcmask 261120
  %v63 = vsel %vm62, %v46, 0.0
  %64 = vadd.xlane.f32.xlu0 %v63
  %v65 = vpop.xlane.xlu0 %64
  %v66 = vsel %vm62, %v47, 0.0
  %67 = vadd.xlane.f32.xlu0 %v66
  %v68 = vpop.xlane.xlu0 %67
  %v69 = vsel %vm62, %v48, 0.0
  %70 = vadd.xlane.f32.xlu0 %v69
  %v71 = vpop.xlane.xlu0 %70
  %v72 = vsel %vm62, %v49, 0.0
  %73 = vadd.xlane.f32.xlu0 %v72
  %v74 = vpop.xlane.xlu0 %73
  %v75 = vsel %vm62, %v50, 0.0
  %76 = vadd.xlane.f32.xlu0 %v75
  %v77 = vpop.xlane.xlu0 %76
  %v78 = vsel %vm62, %v51, 0.0
  %79 = vadd.xlane.f32.xlu0 %v78
  %v80 = vpop.xlane.xlu0 %79
  %v81 = vsel %vm62, %v52, 0.0
  %82 = vadd.xlane.f32.xlu0 %v81
  %v83 = vpop.xlane.xlu0 %82
  %v84 = vsel %vm62, %v53, 0.0
  %85 = vadd.xlane.f32.xlu0 %v84
  %v86 = vpop.xlane.xlu0 %85
  %v87 = vsel %vm62, %v54, 0.0
  %88 = vadd.xlane.f32.xlu0 %v87
  %v89 = vpop.xlane.xlu0 %88
  %v90 = vsel %vm62, %v55, 0.0
  %91 = vadd.xlane.f32.xlu0 %v90
  %v92 = vpop.xlane.xlu0 %91
  %v93 = vsel %vm62, %v56, 0.0
  %94 = vadd.xlane.f32.xlu0 %v93
  %v95 = vpop.xlane.xlu0 %94
  %v96 = vsel %vm62, %v57, 0.0
  %97 = vadd.xlane.f32.xlu0 %v96
  %v98 = vpop.xlane.xlu0 %97
  %v99 = vsel %vm62, %v58, 0.0
  %100 = vadd.xlane.f32.xlu0 %v99
  %v101 = vpop.xlane.xlu0 %100
  %v102 = vsel %vm62, %v59, 0.0
  %103 = vadd.xlane.f32.xlu0 %v102
  %v104 = vpop.xlane.xlu0 %103
  %v105 = vsel %vm62, %v60, 0.0
  %106 = vadd.xlane.f32.xlu0 %v105
  %v107 = vpop.xlane.xlu0 %106
  %v108 = vsel %vm62, %v61, 0.0
  %109 = vadd.xlane.f32.xlu0 %v108
  %v110 = vpop.xlane.xlu0 %109
  %v111 = vld [vmem:[%s3] sm:$0x1]
  %v112 = vstv %s24
  %v113 = vmul.f32 %v111, %v112
  %v114 = vstv %s25
  %v115 = vadd.f32 %v113, %v114
  %v116 = vstv %s23
  %v117 = vadd.f32 %v65, %v116
  %v118 = vadd.f32 %v68, %v116
  %v119 = vadd.f32 %v71, %v116
  %v120 = vadd.f32 %v74, %v116
  %v121 = vadd.f32 %v77, %v116
  %v122 = vadd.f32 %v80, %v116
  %v123 = vadd.f32 %v83, %v116
  %v124 = vadd.f32 %v86, %v116
  %v125 = vadd.f32 %v89, %v116
  %v126 = vadd.f32 %v92, %v116
  %v127 = vadd.f32 %v95, %v116
  %v128 = vadd.f32 %v98, %v116
  %v129 = vadd.f32 %v101, %v116
  %v130 = vadd.f32 %v104, %v116
  %v131 = vadd.f32 %v107, %v116
  %v132 = vadd.f32 %v110, %v116
  %v134 = vperm.slane %v115, 0
  %v135 = vlaneseq
  %v136 = vshrl.u32 %v135, 7
  %138 = vset.pattern.permute.xlu0 %v136
  %139 = vperm.xlu0 %138, %v134
  %v140 = vpop.permute.xlu0 %139
  %v141 = vlaneseq
  %v142 = vshrl.u32 %v141, 7
  %v143 = vadd.s32 %v142, 8
  %144 = vset.pattern.permute.xlu0 %v143
  %145 = vperm.xlu0 %144, %v134
  %v146 = vpop.permute.xlu0 %145
  %v147 = vlaneseq
  %v148 = vshrl.u32 %v147, 7
  %v149 = vadd.s32 %v148, 16
  %150 = vset.pattern.permute.xlu0 %v149
  %151 = vperm.xlu0 %150, %v134
  %v152 = vpop.permute.xlu0 %151
  %v153 = vlaneseq
  %v154 = vshrl.u32 %v153, 7
  %v155 = vadd.s32 %v154, 24
  %156 = vset.pattern.permute.xlu0 %v155
  %157 = vperm.xlu0 %156, %v134
  %v158 = vpop.permute.xlu0 %157
  %v159 = vlaneseq
  %v160 = vshrl.u32 %v159, 7
  %v161 = vadd.s32 %v160, 32
  %162 = vset.pattern.permute.xlu0 %v161
  %163 = vperm.xlu0 %162, %v134
  %v164 = vpop.permute.xlu0 %163
  %v165 = vlaneseq
  %v166 = vshrl.u32 %v165, 7
  %v167 = vadd.s32 %v166, 40
  %168 = vset.pattern.permute.xlu0 %v167
  %169 = vperm.xlu0 %168, %v134
  %v170 = vpop.permute.xlu0 %169
  %v171 = vlaneseq
  %v172 = vshrl.u32 %v171, 7
  %v173 = vadd.s32 %v172, 48
  %174 = vset.pattern.permute.xlu0 %v173
  %175 = vperm.xlu0 %174, %v134
  %v176 = vpop.permute.xlu0 %175
  %v177 = vlaneseq
  %v178 = vshrl.u32 %v177, 7
  %v179 = vadd.s32 %v178, 56
  %180 = vset.pattern.permute.xlu0 %v179
  %181 = vperm.xlu0 %180, %v134
  %v182 = vpop.permute.xlu0 %181
  %v183 = vlaneseq
  %v184 = vshrl.u32 %v183, 7
  %v185 = vadd.s32 %v184, 64
  %186 = vset.pattern.permute.xlu0 %v185
  %187 = vperm.xlu0 %186, %v134
  %v188 = vpop.permute.xlu0 %187
  %v189 = vlaneseq
  %v190 = vshrl.u32 %v189, 7
  %v191 = vadd.s32 %v190, 72
  %192 = vset.pattern.permute.xlu0 %v191
  %193 = vperm.xlu0 %192, %v134
  %v194 = vpop.permute.xlu0 %193
  %v195 = vlaneseq
  %v196 = vshrl.u32 %v195, 7
  %v197 = vadd.s32 %v196, 80
  %198 = vset.pattern.permute.xlu0 %v197
  %199 = vperm.xlu0 %198, %v134
  %v200 = vpop.permute.xlu0 %199
  %v201 = vlaneseq
  %v202 = vshrl.u32 %v201, 7
  %v203 = vadd.s32 %v202, 88
  %204 = vset.pattern.permute.xlu0 %v203
  %205 = vperm.xlu0 %204, %v134
  %v206 = vpop.permute.xlu0 %205
  %v207 = vlaneseq
  %v208 = vshrl.u32 %v207, 7
  %v209 = vadd.s32 %v208, 96
  %210 = vset.pattern.permute.xlu0 %v209
  %211 = vperm.xlu0 %210, %v134
  %v212 = vpop.permute.xlu0 %211
  %v213 = vlaneseq
  %v214 = vshrl.u32 %v213, 7
  %v215 = vadd.s32 %v214, 104
  %216 = vset.pattern.permute.xlu0 %v215
  %217 = vperm.xlu0 %216, %v134
  %v218 = vpop.permute.xlu0 %217
  %v219 = vlaneseq
  %v220 = vshrl.u32 %v219, 7
  %v221 = vadd.s32 %v220, 112
  %222 = vset.pattern.permute.xlu0 %v221
  %223 = vperm.xlu0 %222, %v134
  %v224 = vpop.permute.xlu0 %223
  %v225 = vlaneseq
  %v226 = vshrl.u32 %v225, 7
  %v227 = vadd.s32 %v226, 120
  %228 = vset.pattern.permute.xlu0 %v227
  %229 = vperm.xlu0 %228, %v134
  %v230 = vpop.permute.xlu0 %229
  %v247 = vadd.f32 %v117, %v140
  %v248 = vadd.f32 %v118, %v146
  %v249 = vadd.f32 %v119, %v152
  %v250 = vadd.f32 %v120, %v158
  %v251 = vadd.f32 %v121, %v164
  %v252 = vadd.f32 %v122, %v170
  %v253 = vadd.f32 %v123, %v176
  %v254 = vadd.f32 %v124, %v182
  %v255 = vadd.f32 %v125, %v188
  %v256 = vadd.f32 %v126, %v194
  %v257 = vadd.f32 %v127, %v200
  %v258 = vadd.f32 %v128, %v206
  %v259 = vadd.f32 %v129, %v212
  %v260 = vadd.f32 %v130, %v218
  %v261 = vadd.f32 %v131, %v224
  %v262 = vadd.f32 %v132, %v230
  %279 = vset.pattern.permute.xlu0 0
  %280 = vperm.xlu0 %279, %v247
  %v281 = vpop.permute.xlu0 %280
  %282 = vset.pattern.permute.xlu0 0
  %283 = vperm.xlu0 %282, %v248
  %v284 = vpop.permute.xlu0 %283
  %285 = vset.pattern.permute.xlu0 0
  %286 = vperm.xlu0 %285, %v249
  %v287 = vpop.permute.xlu0 %286
  %288 = vset.pattern.permute.xlu0 0
  %289 = vperm.xlu0 %288, %v250
  %v290 = vpop.permute.xlu0 %289
  %291 = vset.pattern.permute.xlu0 0
  %292 = vperm.xlu0 %291, %v251
  %v293 = vpop.permute.xlu0 %292
  %294 = vset.pattern.permute.xlu0 0
  %295 = vperm.xlu0 %294, %v252
  %v296 = vpop.permute.xlu0 %295
  %297 = vset.pattern.permute.xlu0 0
  %298 = vperm.xlu0 %297, %v253
  %v299 = vpop.permute.xlu0 %298
  %300 = vset.pattern.permute.xlu0 0
  %301 = vperm.xlu0 %300, %v254
  %v302 = vpop.permute.xlu0 %301
  %303 = vset.pattern.permute.xlu0 0
  %304 = vperm.xlu0 %303, %v255
  %v305 = vpop.permute.xlu0 %304
  %306 = vset.pattern.permute.xlu0 0
  %307 = vperm.xlu0 %306, %v256
  %v308 = vpop.permute.xlu0 %307
  %309 = vset.pattern.permute.xlu0 0
  %310 = vperm.xlu0 %309, %v257
  %v311 = vpop.permute.xlu0 %310
  %312 = vset.pattern.permute.xlu0 0
  %313 = vperm.xlu0 %312, %v258
  %v314 = vpop.permute.xlu0 %313
  %315 = vset.pattern.permute.xlu0 0
  %316 = vperm.xlu0 %315, %v259
  %v317 = vpop.permute.xlu0 %316
  %318 = vset.pattern.permute.xlu0 0
  %319 = vperm.xlu0 %318, %v260
  %v320 = vpop.permute.xlu0 %319
  %321 = vset.pattern.permute.xlu0 0
  %322 = vperm.xlu0 %321, %v261
  %v323 = vpop.permute.xlu0 %322
  %324 = vset.pattern.permute.xlu0 0
  %325 = vperm.xlu0 %324, %v262
  %v326 = vpop.permute.xlu0 %325
  %v327 = vlaneseq
  %v328 = vand.u32 %v327, 127
  %v329 = vperm.slane %v281, %v328
  %v330 = vadd.s32 %v328, 4294967288
  %v331 = vperm.slane %v284, %v330
  %vm332 = vcmask 130112
  %v333 = vsel %vm332, %v331, %v329
  %v334 = vadd.s32 %v328, 4294967280
  %v335 = vperm.slane %v287, %v334
  %vm336 = vcmask 195712
  %v337 = vsel %vm336, %v335, %v333
  %v338 = vadd.s32 %v328, 4294967272
  %v339 = vperm.slane %v290, %v338
  %vm340 = vcmask 261312
  %v341 = vsel %vm340, %v339, %v337
  %v342 = vadd.s32 %v328, 4294967264
  %v343 = vperm.slane %v293, %v342
  %vm344 = vcmask 326912
  %v345 = vsel %vm344, %v343, %v341
  %v346 = vadd.s32 %v328, 4294967256
  %v347 = vperm.slane %v296, %v346
  %vm348 = vcmask 392512
  %v349 = vsel %vm348, %v347, %v345
  %v350 = vadd.s32 %v328, 4294967248
  %v351 = vperm.slane %v299, %v350
  %vm352 = vcmask 458112
  %v353 = vsel %vm352, %v351, %v349
  %v354 = vadd.s32 %v328, 4294967240
  %v355 = vperm.slane %v302, %v354
  %vm356 = vcmask 523712
  %v357 = vsel %vm356, %v355, %v353
  %v358 = vadd.s32 %v328, 4294967232
  %v359 = vperm.slane %v305, %v358
  %vm360 = vcmask 589312
  %v361 = vsel %vm360, %v359, %v357
  %v362 = vadd.s32 %v328, 4294967224
  %v363 = vperm.slane %v308, %v362
  %vm364 = vcmask 654912
  %v365 = vsel %vm364, %v363, %v361
  %v366 = vadd.s32 %v328, 4294967216
  %v367 = vperm.slane %v311, %v366
  %vm368 = vcmask 720512
  %v369 = vsel %vm368, %v367, %v365
  %v370 = vadd.s32 %v328, 4294967208
  %v371 = vperm.slane %v314, %v370
  %vm372 = vcmask 786112
  %v373 = vsel %vm372, %v371, %v369
  %v374 = vadd.s32 %v328, 4294967200
  %v375 = vperm.slane %v317, %v374
  %vm376 = vcmask 851712
  %v377 = vsel %vm376, %v375, %v373
  %v378 = vadd.s32 %v328, 4294967192
  %v379 = vperm.slane %v320, %v378
  %vm380 = vcmask 917312
  %v381 = vsel %vm380, %v379, %v377
  %v382 = vadd.s32 %v328, 4294967184
  %v383 = vperm.slane %v323, %v382
  %vm384 = vcmask 982912
  %v385 = vsel %vm384, %v383, %v381
  %v386 = vadd.s32 %v328, 4294967176
  %v387 = vperm.slane %v326, %v386
  %vm388 = vcmask 1048512
  %v389 = vsel %vm388, %v387, %v385
  %391 = vst [vmem:[%s4] sm:$0x1] %v389
  // Predicated region
  $region14: #{aldnet0_forward.1} parent=0 // pred_check
    _
  $region15: #{aldnet0_forward.1} parent=0 // pred_check_branch
    %393 = sbr.rel (0) target = $region17
  $region16: #{aldnet0_forward.1} parent=0 // pred_region
    _
  $region17: #{aldnet0_forward.1} parent=0 // pred_fallthru
    _
  // Predicated region
  $region18: #{aldnet0_forward.1} parent=0 // pred_check
    _
  $region19: #{aldnet0_forward.1} parent=0 // pred_check_branch
    %395 = sbr.rel (0) target = $region21
  $region20: #{aldnet0_forward.1} parent=0 // pred_region
    _
  $region21: #{aldnet0_forward.1} parent=0 // pred_fallthru
    _

</llo_original>
